<compile_context>
chip_gen: v5e
topology: v5e:2x2
jax: 0.10.0
libtpu: 0.0.40
codegen_flags: <defaults>
</compile_context>

<pallas_src>
import jax
import jax.numpy as jnp
from jax.experimental import pallas as pl
from jax.experimental.pallas import tpu as pltpu


# ------------------------------ helpers ---------------------------------------
def _round_up(x, m):
    return ((x + m - 1) // m) * m


def _patchify(x, patch):
    # Used only by the pure-JAX reference (original base semantics).
    B, C, H, W = x.shape
    x = x.reshape(B, C, H // patch, patch, W // patch, patch)
    x = jnp.transpose(x, (0, 2, 4, 1, 3, 5))
    return x.reshape(B, (H // patch) * (W // patch), C * patch * patch)


def _pick_batch_tile(B, sub=16, max_tile=512):
    """Batch tile: multiple of `sub` (bf16 sublane tile), <= max_tile, and
    >= 2 grid steps when the batch allows it (v7x dual-TensorCore sharding)."""
    B_al = _round_up(max(B, 1), sub)
    if B_al <= sub:
        return B_al
    n_steps = max(2, -(-B_al // max_tile))
    return min(max_tile, _round_up(-(-B_al // n_steps), sub))


# ----------------------------- Pallas kernel ----------------------------------
def _encoder_kernel(obs_ref, goal_ref,        # [BT, C*H*W] bf16 raw pixels
                    w_obs_ref, w_goal_ref,    # [C*H*W, Hm] bf16 (fully folded)
                    b_fuse_ref,               # [1, Hm]   f32
                    w_hid_ref, b_hid_ref,     # [Hm, E], [1, E] f32
                    w_head_ref, b_head_ref,   # [E, Dout], [1, Dout] f32
                    out_ref):                 # [BT, Dout] f32
    # Fusion layer 1 (patch-embed + preprocess + mean-pool pre-composed into
    # the weights): two lane-dense [BT,768] x [768,Hm] matmuls, f32 accumulate.
    h = (jnp.dot(obs_ref[...], w_obs_ref[...], preferred_element_type=jnp.float32)
         + jnp.dot(goal_ref[...], w_goal_ref[...], preferred_element_type=jnp.float32)
         + b_fuse_ref[...])
    h = jnp.maximum(h, 0.0)                                        # ReLU

    last_hidden = jnp.tanh(
        jnp.dot(h, w_hid_ref[...], preferred_element_type=jnp.float32)
        + b_hid_ref[...])                                          # [BT, E]

    # Fused head: dense mode w_head = [eye(E) | wd | wc] -> one matmul emits
    # [last_hidden, dist, conf]; sparse mode w_head = [wd | wc].
    head = (jnp.dot(last_hidden, w_head_ref[...],
                    preferred_element_type=jnp.float32)
            + b_head_ref[...])                                     # [BT, Dout]
    conf_col = head.shape[-1] - 1          # last column = confidence -> sigmoid
    col = jax.lax.broadcasted_iota(jnp.int32, head.shape, 1)
    out_ref[...] = jnp.where(col == conf_col, jax.nn.sigmoid(head), head)


# ------------------------------ wrapper ----------------------------------------
class TemporalDistanceEncoderPallas:
    def __init__(self, embed_dim=32, hidden_dim=64, patch=8, img_size=16,
                 mode="dense", seed=0):
        assert mode in ("dense", "sparse")
        self.mode = mode
        self.embed_dim = embed_dim
        self.hidden_dim = hidden_dim
        self.patch = patch
        self.img_size = img_size
        C = 3
        Hm, E = hidden_dim, embed_dim
        Hpix = Wpix = img_size
        P = (Hpix // patch) * (Wpix // patch)
        Dp = C * patch * patch
        self.n_pixels = C * Hpix * Wpix
        self.output_dim = embed_dim + 2 if mode == "dense" else 2

        # Deterministic synthetic base parameters (frozen — no grads).
        k = jax.random.PRNGKey(seed)
        ks = jax.random.split(k, 6)
        s = lambda fan_in: 1.0 / jnp.sqrt(fan_in)
        self.wp = jax.random.normal(ks[0], (Dp, E), jnp.float32) * s(Dp)
        self.wf = jax.random.normal(ks[1], (2 * E, Hm), jnp.float32) * s(2 * E)
        self.bf = jnp.zeros((1, Hm), jnp.float32)
        self.wh = jax.random.normal(ks[2], (Hm, E), jnp.float32) * s(Hm)
        self.bh = jnp.zeros((1, E), jnp.float32)
        self.wd = jax.random.normal(ks[3], (E, 1), jnp.float32) * s(E)
        self.wc = jax.random.normal(ks[4], (E, 1), jnp.float32) * s(E)
        self.bdc = jnp.array([[0.0, 0.0]], jnp.float32)

        # ----- fully folded / restructured parameters used by the kernel -----
        # 1) patchify + preprocess affine (x*(2/255)-1) + patch embed + mean-pool
        #    as one [C*H*W, E] linear map over the flat NCHW image:
        wp_scaled = self.wp * (2.0 / (255.0 * P))                    # [Dp, E]
        w_full = jnp.broadcast_to(wp_scaled[None], (P, Dp, E))       # [P, Dp, E]
        w_full = w_full.reshape(Hpix // patch, Wpix // patch, C, patch, patch, E)
        w_full = jnp.transpose(w_full, (2, 0, 3, 1, 4, 5))           # NCHW order
        w_full = w_full.reshape(self.n_pixels, E)                    # [CHW, E]
        bp = -jnp.sum(self.wp, axis=0, keepdims=True)                # [1, E]

        # 2) pre-compose with fusion layer 1 (concat-free split of wf):
        wf_obs, wf_goal = self.wf[:E], self.wf[E:]
        self.w_obs = (w_full @ wf_obs).astype(jnp.bfloat16)          # [CHW, Hm]
        self.w_goal = (w_full @ wf_goal).astype(jnp.bfloat16)        # [CHW, Hm]
        self.b_fuse = bp @ wf_obs + bp @ wf_goal + self.bf           # [1, Hm]

        # 3) fused head: dense emits [last_hidden, dist, conf] in one matmul.
        if mode == "dense":
            self.w_head = jnp.concatenate(
                [jnp.eye(E, dtype=jnp.float32), self.wd, self.wc], axis=1)
            self.b_head = jnp.concatenate(
                [jnp.zeros((1, E), jnp.float32), self.bdc], axis=1)
        else:
            self.w_head = jnp.concatenate([self.wd, self.wc], axis=1)  # [E, 2]
            self.b_head = self.bdc                                     # [1, 2]

    def __call__(self, observations, goals):
        # observations, goals: float32 NCHW in [0, 255]
        B = observations.shape[0]
        npx = self.n_pixels
        # Lane-dense [B, C*H*W] bf16 streams (no patchify round-trip; halves
        # the dominant HBM read traffic). 768 = 6 * 128 -> clean (16,128) tiles.
        obs = observations.astype(jnp.float32).reshape(B, npx).astype(jnp.bfloat16)
        goal = goals.astype(jnp.float32).reshape(B, npx).astype(jnp.bfloat16)

        BT = _pick_batch_tile(B)                 # multiple of 16, <= 512
        B_pad = _round_up(B, BT)
        if B_pad != B:
            obs = jnp.pad(obs, ((0, B_pad - B), (0, 0)))
            goal = jnp.pad(goal, ((0, B_pad - B), (0, 0)))
        nb = B_pad // BT

        batch_spec = pl.BlockSpec((BT, npx), lambda i: (i, 0))

        def wspec(arr):
            return pl.BlockSpec(arr.shape, lambda i, _nd=arr.ndim: (0,) * _nd)

        weights = (self.w_obs, self.w_goal, self.b_fuse,
                   self.wh, self.bh, self.w_head, self.b_head)
        in_specs = [batch_spec, batch_spec] + [wspec(w) for w in weights]

        Dout = self.output_dim
        out = pl.pallas_call(
            _encoder_kernel,
            grid=(nb,),
            in_specs=in_specs,
            out_specs=pl.BlockSpec((BT, Dout), lambda i: (i, 0)),
            out_shape=jax.ShapeDtypeStruct((B_pad, Dout), jnp.float32),
            compiler_params=pltpu.CompilerParams(
                dimension_semantics=("parallel",)),
        )(obs, goal, *weights)

        return out[:B]

    # Pure-JAX f32 reference matching the original (unfused) base semantics.
    def reference(self, observations, goals):
        def embed(x):
            x = _patchify(x.astype(jnp.float32), self.patch)
            x = x * (2.0 / 255.0) - 1.0
            e = jnp.einsum("bpd,de->bpe", x, self.wp)
            return e.mean(axis=1)
        obs_e, goal_e = embed(observations), embed(goals)
        fused = jnp.concatenate([obs_e, goal_e], axis=1)
        h = jnp.maximum(fused @ self.wf + self.bf, 0.0)
        last_hidden = jnp.tanh(h @ self.wh + self.bh)
        dist = last_hidden @ self.wd + self.bdc[0, 0]
        conf = jax.nn.sigmoid(last_hidden @ self.wc + self.bdc[0, 1])
        out = jnp.concatenate([last_hidden, dist, conf], axis=1)
        return out[:, self.embed_dim:] if self.mode == "sparse" else out


# --------------------------------- main ----------------------------------------
if __name__ == "__main__":
    key = jax.random.PRNGKey(0)
    k_obs, k_goal = jax.random.split(key)
    B, C, H, W = 2, 3, 16, 16
    observations = jax.random.uniform(k_obs, (B, C, H, W), jnp.float32, 0.0, 255.0)
    goals = jax.random.uniform(k_goal, (B, C, H, W), jnp.float32, 0.0, 255.0)

    # bf16 inputs / first-layer weights => loosened tolerance vs the f32 reference.
    TOL = dict(atol=2e-2, rtol=2e-2)

    # dense mode: [last_hidden, dist, conf] -> [B, embed_dim + 2]
    enc = TemporalDistanceEncoderPallas(embed_dim=32, hidden_dim=64,
                                        patch=8, img_size=16, mode="dense")
    out = enc(observations, goals)
    jax.block_until_ready(out)
    ref = enc.reference(observations, goals)
    assert out.shape == (B, enc.embed_dim + 2), out.shape
    assert jnp.allclose(out, ref, **TOL), "dense mismatch vs reference"

    # sparse mode: [dist, conf] -> [B, 2]
    enc_s = TemporalDistanceEncoderPallas(embed_dim=32, hidden_dim=64,
                                          patch=8, img_size=16, mode="sparse")
    out_s = enc_s(observations, goals)
    jax.block_until_ready(out_s)
    ref_s = enc_s.reference(observations, goals)
    assert out_s.shape == (B, 2), out_s.shape
    assert jnp.allclose(out_s, ref_s, **TOL), "sparse mismatch vs reference"

    # TODO(synk): ColorJitter / RandomResizedCrop augmentations have no clean
    # Pallas equivalent and are disabled by default (rgb_color_jitter=0,
    # random_crop=False), so they are omitted.
    print("KERNEL_OK")
</pallas_src>

<mosaic_0001>
module attributes {stable_mosaic.version = 11 : i64} {
  func.func @_encoder_kernel(%arg0: i32, %arg1: memref<16x768xbf16, #tpu.memory_space<vmem>>, %arg2: memref<16x768xbf16, #tpu.memory_space<vmem>>, %arg3: memref<768x64xbf16, #tpu.memory_space<vmem>>, %arg4: memref<768x64xbf16, #tpu.memory_space<vmem>>, %arg5: memref<1x64xf32, #tpu.memory_space<vmem>>, %arg6: memref<64x32xf32, #tpu.memory_space<vmem>>, %arg7: memref<1x32xf32, #tpu.memory_space<vmem>>, %arg8: memref<32x34xf32, #tpu.memory_space<vmem>>, %arg9: memref<1x34xf32, #tpu.memory_space<vmem>>, %arg10: memref<16x34xf32, #tpu.memory_space<vmem>>) attributes {dimension_semantics = [#tpu.dimension_semantics<parallel>], iteration_bounds = array<i64: 1>, scalar_prefetch = 0 : i64, scratch_operands = 0 : i64, tpu.core_type = #tpu.core_type<tc>, window_params = [{transform_indices = @transform_0, window_bounds = array<i64: 16, 768>}, {transform_indices = @transform_1, window_bounds = array<i64: 16, 768>}, {pipeline_mode = #tpu.pipeline_mode<synchronous>, transform_indices = @transform_2, window_bounds = array<i64: 768, 64>}, {pipeline_mode = #tpu.pipeline_mode<synchronous>, transform_indices = @transform_3, window_bounds = array<i64: 768, 64>}, {pipeline_mode = #tpu.pipeline_mode<synchronous>, transform_indices = @transform_4, window_bounds = array<i64: 1, 64>}, {pipeline_mode = #tpu.pipeline_mode<synchronous>, transform_indices = @transform_5, window_bounds = array<i64: 64, 32>}, {pipeline_mode = #tpu.pipeline_mode<synchronous>, transform_indices = @transform_6, window_bounds = array<i64: 1, 32>}, {pipeline_mode = #tpu.pipeline_mode<synchronous>, transform_indices = @transform_7, window_bounds = array<i64: 32, 34>}, {pipeline_mode = #tpu.pipeline_mode<synchronous>, transform_indices = @transform_8, window_bounds = array<i64: 1, 34>}, {transform_indices = @transform_9, window_bounds = array<i64: 16, 34>}]} {
    %c0 = arith.constant 0 : index
    %c0_0 = arith.constant 0 : index
    %0 = vector.load %arg1[%c0, %c0_0] : memref<16x768xbf16, #tpu.memory_space<vmem>>, vector<16x768xbf16>
    %c0_1 = arith.constant 0 : index
    %c0_2 = arith.constant 0 : index
    %1 = vector.load %arg3[%c0_1, %c0_2] : memref<768x64xbf16, #tpu.memory_space<vmem>>, vector<768x64xbf16>
    %cst = arith.constant dense<0.000000e+00> : vector<16x64xf32>
    %2 = tpu.matmul %0, %1, %cst {dimension_numbers = #tpu.dot_dimension_numbers<[1], [0], [0], [1], [0, 0, 1, 1], [], []>} : vector<16x768xbf16>, vector<768x64xbf16>, vector<16x64xf32> -> vector<16x64xf32>
    %c0_3 = arith.constant 0 : index
    %c0_4 = arith.constant 0 : index
    %3 = vector.load %arg2[%c0_3, %c0_4] : memref<16x768xbf16, #tpu.memory_space<vmem>>, vector<16x768xbf16>
    %c0_5 = arith.constant 0 : index
    %c0_6 = arith.constant 0 : index
    %4 = vector.load %arg4[%c0_5, %c0_6] : memref<768x64xbf16, #tpu.memory_space<vmem>>, vector<768x64xbf16>
    %cst_7 = arith.constant dense<0.000000e+00> : vector<16x64xf32>
    %5 = tpu.matmul %3, %4, %cst_7 {dimension_numbers = #tpu.dot_dimension_numbers<[1], [0], [0], [1], [0, 0, 1, 1], [], []>} : vector<16x768xbf16>, vector<768x64xbf16>, vector<16x64xf32> -> vector<16x64xf32>
    %6 = arith.addf %2, %5 : vector<16x64xf32>
    %c0_8 = arith.constant 0 : index
    %c0_9 = arith.constant 0 : index
    %7 = vector.load %arg5[%c0_8, %c0_9] : memref<1x64xf32, #tpu.memory_space<vmem>>, vector<1x64xf32>
    %8 = vector.broadcast %7 : vector<1x64xf32> to vector<16x64xf32>
    %9 = arith.addf %6, %8 : vector<16x64xf32>
    %cst_10 = arith.constant 0.000000e+00 : f32
    %10 = vector.broadcast %cst_10 : f32 to vector<16x64xf32>
    %11 = arith.maximumf %9, %10 : vector<16x64xf32>
    %c0_11 = arith.constant 0 : index
    %c0_12 = arith.constant 0 : index
    %12 = vector.load %arg6[%c0_11, %c0_12] : memref<64x32xf32, #tpu.memory_space<vmem>>, vector<64x32xf32>
    %cst_13 = arith.constant dense<0.000000e+00> : vector<16x32xf32>
    %13 = tpu.matmul %11, %12, %cst_13 {dimension_numbers = #tpu.dot_dimension_numbers<[1], [0], [0], [1], [0, 0, 1, 1], [], []>} : vector<16x64xf32>, vector<64x32xf32>, vector<16x32xf32> -> vector<16x32xf32>
    %c0_14 = arith.constant 0 : index
    %c0_15 = arith.constant 0 : index
    %14 = vector.load %arg7[%c0_14, %c0_15] : memref<1x32xf32, #tpu.memory_space<vmem>>, vector<1x32xf32>
    %15 = vector.broadcast %14 : vector<1x32xf32> to vector<16x32xf32>
    %16 = arith.addf %13, %15 : vector<16x32xf32>
    %17 = math.tanh %16 : vector<16x32xf32>
    %c0_16 = arith.constant 0 : index
    %c0_17 = arith.constant 0 : index
    %18 = vector.load %arg8[%c0_16, %c0_17] : memref<32x34xf32, #tpu.memory_space<vmem>>, vector<32x34xf32>
    %cst_18 = arith.constant dense<0.000000e+00> : vector<16x34xf32>
    %19 = tpu.matmul %17, %18, %cst_18 {dimension_numbers = #tpu.dot_dimension_numbers<[1], [0], [0], [1], [0, 0, 1, 1], [], []>} : vector<16x32xf32>, vector<32x34xf32>, vector<16x34xf32> -> vector<16x34xf32>
    %c0_19 = arith.constant 0 : index
    %c0_20 = arith.constant 0 : index
    %20 = vector.load %arg9[%c0_19, %c0_20] : memref<1x34xf32, #tpu.memory_space<vmem>>, vector<1x34xf32>
    %21 = vector.broadcast %20 : vector<1x34xf32> to vector<16x34xf32>
    %22 = arith.addf %19, %21 : vector<16x34xf32>
    %23 = tpu.iota {dimensions = array<i32: 1>} : vector<16x34xi32>
    %c33_i32 = arith.constant 33 : i32
    %24 = vector.broadcast %c33_i32 : i32 to vector<16x34xi32>
    %25 = arith.cmpi eq, %23, %24 : vector<16x34xi32>
    %26 = arith.negf %22 : vector<16x34xf32>
    %27 = math.exp %26 : vector<16x34xf32>
    %cst_21 = arith.constant 1.000000e+00 : f32
    %28 = vector.broadcast %cst_21 : f32 to vector<16x34xf32>
    %29 = arith.addf %28, %27 : vector<16x34xf32>
    %30 = arith.divf %28, %29 : vector<16x34xf32>
    %31 = arith.select %25, %30, %22 : vector<16x34xi1>, vector<16x34xf32>
    %c0_22 = arith.constant 0 : index
    %c0_23 = arith.constant 0 : index
    %32 = vector.load %arg10[%c0_22, %c0_23] : memref<16x34xf32, #tpu.memory_space<vmem>>, vector<16x34xf32>
    tpu.vector_store %arg10[%c0_22, %c0_23], %31 {strides = array<i32>} : memref<16x34xf32, #tpu.memory_space<vmem>>, vector<16x34xf32>,
    return
  }
  func.func @transform_0(%arg0: i32) -> (i32, i32) {
    %c0_i32 = arith.constant 0 : i32
    %c0_i32_0 = arith.constant 0 : i32
    return %arg0, %c0_i32 : i32, i32
  }
  func.func @transform_1(%arg0: i32) -> (i32, i32) {
    %c0_i32 = arith.constant 0 : i32
    %c0_i32_0 = arith.constant 0 : i32
    return %arg0, %c0_i32 : i32, i32
  }
  func.func @transform_2(%arg0: i32) -> (i32, i32) {
    %c0_i32 = arith.constant 0 : i32
    %c0_i32_0 = arith.constant 0 : i32
    %c0_i32_1 = arith.constant 0 : i32
    return %c0_i32, %c0_i32_0 : i32, i32
  }
  func.func @transform_3(%arg0: i32) -> (i32, i32) {
    %c0_i32 = arith.constant 0 : i32
    %c0_i32_0 = arith.constant 0 : i32
    %c0_i32_1 = arith.constant 0 : i32
    return %c0_i32, %c0_i32_0 : i32, i32
  }
  func.func @transform_4(%arg0: i32) -> (i32, i32) {
    %c0_i32 = arith.constant 0 : i32
    %c0_i32_0 = arith.constant 0 : i32
    %c0_i32_1 = arith.constant 0 : i32
    return %c0_i32, %c0_i32_0 : i32, i32
  }
  func.func @transform_5(%arg0: i32) -> (i32, i32) {
    %c0_i32 = arith.constant 0 : i32
    %c0_i32_0 = arith.constant 0 : i32
    %c0_i32_1 = arith.constant 0 : i32
    return %c0_i32, %c0_i32_0 : i32, i32
  }
  func.func @transform_6(%arg0: i32) -> (i32, i32) {
    %c0_i32 = arith.constant 0 : i32
    %c0_i32_0 = arith.constant 0 : i32
    %c0_i32_1 = arith.constant 0 : i32
    return %c0_i32, %c0_i32_0 : i32, i32
  }
  func.func @transform_7(%arg0: i32) -> (i32, i32) {
    %c0_i32 = arith.constant 0 : i32
    %c0_i32_0 = arith.constant 0 : i32
    %c0_i32_1 = arith.constant 0 : i32
    return %c0_i32, %c0_i32_0 : i32, i32
  }
  func.func @transform_8(%arg0: i32) -> (i32, i32) {
    %c0_i32 = arith.constant 0 : i32
    %c0_i32_0 = arith.constant 0 : i32
    %c0_i32_1 = arith.constant 0 : i32
    return %c0_i32, %c0_i32_0 : i32, i32
  }
  func.func @transform_9(%arg0: i32) -> (i32, i32) {
    %c0_i32 = arith.constant 0 : i32
    %c0_i32_0 = arith.constant 0 : i32
    return %arg0, %c0_i32 : i32, i32
  }
}

</mosaic_0001>

<llo_original>
// kernel: tpu_custom_call.1
$region0: #{tpu_custom_call.1}
  #allocation0 [shape = 'u32[]', space=smem, size = 0x4, offset = 0x4, fixed_abs, tag = 'smem constant byte address 0x4 - core index']
  #allocation1 [shape = 'u32[72,128]{1,0:T(1,128)}', space=vmem, size = 0x9000, scoped, tag = 'internal scratch']
  %s0 = inlined_call_operand.vmem [shape: bf16[16,768], index: 0, kind: input, shape index: {}]
  %s1 = inlined_call_operand.vmem [shape: bf16[16,768], index: 1, kind: input, shape index: {}]
  %s2 = inlined_call_operand.vmem [shape: bf16[768,64], index: 2, kind: input, shape index: {}]
  %s3 = inlined_call_operand.vmem [shape: bf16[768,64], index: 3, kind: input, shape index: {}]
  %s4 = inlined_call_operand.vmem [shape: f32[1,64], index: 4, kind: input, shape index: {}]
  %s5 = inlined_call_operand.vmem [shape: f32[64,32], index: 5, kind: input, shape index: {}]
  %s6 = inlined_call_operand.vmem [shape: f32[1,32], index: 6, kind: input, shape index: {}]
  %s7 = inlined_call_operand.vmem [shape: f32[32,34], index: 7, kind: input, shape index: {}]
  %s8 = inlined_call_operand.vmem [shape: f32[1,34], index: 8, kind: input, shape index: {}]
  %s9 = inlined_call_operand.hbm [shape: f32[16,34], index: 9, kind: output, shape index: {}]
  %s10 = sld [smem:[#allocation0]]
  $region46: #{tpu_custom_call.1} parent=0
    _
  %s12 = ssub.s32 1, %s10
  %s13 = scalar_select 0, %s12, %s10
  $region1: #{tpu_custom_call.1} parent=0
    #allocation2 [shape = 'u8[8192]{0}', space=vmem, size = 0x2000, scoped, tag = 'output window, operand 0, single buffered']
    #allocation3 [shape = 's32[1]{0}', space=sflag, size = 0x4, scoped, tag = 'scoped memory for tpu_custom_call.1']
    %14 = vsyncpa [#allocation3], 0
    // Predicated region
    $region2: #{tpu_custom_call.1} parent=1 // pred_check
      _
    $region3: #{tpu_custom_call.1} parent=1 // pred_check_branch
      %16 = sbr.rel (0) target = $region5
    $region4: #{tpu_custom_call.1} parent=1 // pred_region
      _
    $region5: #{tpu_custom_call.1} parent=1 // pred_fallthru
      _
    // Predicated region
    $region6: #{tpu_custom_call.1} parent=1 // pred_check
      _
    $region7: #{tpu_custom_call.1} parent=1 // pred_check_branch
      %18 = sbr.rel (0) target = $region9
    $region8: #{tpu_custom_call.1} parent=1 // pred_region
      _
    $region9: #{tpu_custom_call.1} parent=1 // pred_fallthru
      _
    // Predicated region
    $region10: #{tpu_custom_call.1} parent=1 // pred_check
      _
    $region11: #{tpu_custom_call.1} parent=1 // pred_check_branch
      %20 = sbr.rel (0) target = $region13
    $region12: #{tpu_custom_call.1} parent=1 // pred_region
      _
    $region13: #{tpu_custom_call.1} parent=1 // pred_fallthru
      _
    // Predicated region
    $region14: #{tpu_custom_call.1} parent=1 // pred_check
      _
    $region15: #{tpu_custom_call.1} parent=1 // pred_check_branch
      %22 = sbr.rel (0) target = $region17
    $region16: #{tpu_custom_call.1} parent=1 // pred_region
      _
    $region17: #{tpu_custom_call.1} parent=1 // pred_fallthru
      _
    // Predicated region
    $region18: #{tpu_custom_call.1} parent=1 // pred_check
      _
    $region19: #{tpu_custom_call.1} parent=1 // pred_check_branch
      %24 = sbr.rel (0) target = $region21
    $region20: #{tpu_custom_call.1} parent=1 // pred_region
      _
    $region21: #{tpu_custom_call.1} parent=1 // pred_fallthru
      _
    // Predicated region
    $region22: #{tpu_custom_call.1} parent=1 // pred_check
      _
    $region23: #{tpu_custom_call.1} parent=1 // pred_check_branch
      %26 = sbr.rel (0) target = $region25
    $region24: #{tpu_custom_call.1} parent=1 // pred_region
      _
    $region25: #{tpu_custom_call.1} parent=1 // pred_fallthru
      _
    // Predicated region
    $region26: #{tpu_custom_call.1} parent=1 // pred_check
      _
    $region27: #{tpu_custom_call.1} parent=1 // pred_check_branch
      %28 = sbr.rel (0) target = $region29
    $region28: #{tpu_custom_call.1} parent=1 // pred_region
      _
    $region29: #{tpu_custom_call.1} parent=1 // pred_fallthru
      _
    // Predicated region
    $region30: #{tpu_custom_call.1} parent=1 // pred_check
      _
    $region31: #{tpu_custom_call.1} parent=1 // pred_check_branch
      %30 = sbr.rel (0) target = $region33
    $region32: #{tpu_custom_call.1} parent=1 // pred_region
      _
    $region33: #{tpu_custom_call.1} parent=1 // pred_fallthru
      _
    // Predicated region
    $region34: #{tpu_custom_call.1} parent=1 // pred_check
      _
    $region35: #{tpu_custom_call.1} parent=1 // pred_check_branch
      %32 = sbr.rel (0) target = $region37
    $region36: #{tpu_custom_call.1} parent=1 // pred_region
      _
    $region37: #{tpu_custom_call.1} parent=1 // pred_fallthru
      _
    %v33 = vld [vmem:[%s0] sm:$0xff]
    %v34 = vld [vmem:[%s0 + $0x8] sm:$0xff]
    %v35 = vld [vmem:[%s0 + $0x10] sm:$0xff]
    %v36 = vld [vmem:[%s0 + $0x18] sm:$0xff]
    %v37 = vld [vmem:[%s0 + $0x20] sm:$0xff]
    %v38 = vld [vmem:[%s0 + $0x28] sm:$0xff]
    %v39 = vld [vmem:[%s2] sm:$0xf]
    %v40 = vld [vmem:[%s2 + $0x4] sm:$0xf]
    %v41 = vld [vmem:[%s2 + $0x8] sm:$0xf]
    %v42 = vld [vmem:[%s2 + $0xc] sm:$0xf]
    %v43 = vld [vmem:[%s2 + $0x10] sm:$0xf]
    %v44 = vld [vmem:[%s2 + $0x14] sm:$0xf]
    %v45 = vld [vmem:[%s2 + $0x18] sm:$0xf]
    %v46 = vld [vmem:[%s2 + $0x1c] sm:$0xf]
    %v47 = vld [vmem:[%s2 + $0x20] sm:$0xf]
    %v48 = vld [vmem:[%s2 + $0x24] sm:$0xf]
    %v49 = vld [vmem:[%s2 + $0x28] sm:$0xf]
    %v50 = vld [vmem:[%s2 + $0x2c] sm:$0xf]
    %v51 = vld [vmem:[%s2 + $0x30] sm:$0xf]
    %v52 = vld [vmem:[%s2 + $0x34] sm:$0xf]
    %v53 = vld [vmem:[%s2 + $0x38] sm:$0xf]
    %v54 = vld [vmem:[%s2 + $0x3c] sm:$0xf]
    %v55 = vld [vmem:[%s2 + $0x40] sm:$0xf]
    %v56 = vld [vmem:[%s2 + $0x44] sm:$0xf]
    %v57 = vld [vmem:[%s2 + $0x48] sm:$0xf]
    %v58 = vld [vmem:[%s2 + $0x4c] sm:$0xf]
    %v59 = vld [vmem:[%s2 + $0x50] sm:$0xf]
    %v60 = vld [vmem:[%s2 + $0x54] sm:$0xf]
    %v61 = vld [vmem:[%s2 + $0x58] sm:$0xf]
    %v62 = vld [vmem:[%s2 + $0x5c] sm:$0xf]
    %v63 = vld [vmem:[%s2 + $0x60] sm:$0xf]
    %v64 = vld [vmem:[%s2 + $0x64] sm:$0xf]
    %v65 = vld [vmem:[%s2 + $0x68] sm:$0xf]
    %v66 = vld [vmem:[%s2 + $0x6c] sm:$0xf]
    %v67 = vld [vmem:[%s2 + $0x70] sm:$0xf]
    %v68 = vld [vmem:[%s2 + $0x74] sm:$0xf]
    %v69 = vld [vmem:[%s2 + $0x78] sm:$0xf]
    %v70 = vld [vmem:[%s2 + $0x7c] sm:$0xf]
    %v71 = vld [vmem:[%s2 + $0x80] sm:$0xf]
    %v72 = vld [vmem:[%s2 + $0x84] sm:$0xf]
    %v73 = vld [vmem:[%s2 + $0x88] sm:$0xf]
    %v74 = vld [vmem:[%s2 + $0x8c] sm:$0xf]
    %v75 = vld [vmem:[%s2 + $0x90] sm:$0xf]
    %v76 = vld [vmem:[%s2 + $0x94] sm:$0xf]
    %v77 = vld [vmem:[%s2 + $0x98] sm:$0xf]
    %v78 = vld [vmem:[%s2 + $0x9c] sm:$0xf]
    %v79 = vld [vmem:[%s2 + $0xa0] sm:$0xf]
    %v80 = vld [vmem:[%s2 + $0xa4] sm:$0xf]
    %v81 = vld [vmem:[%s2 + $0xa8] sm:$0xf]
    %v82 = vld [vmem:[%s2 + $0xac] sm:$0xf]
    %v83 = vld [vmem:[%s2 + $0xb0] sm:$0xf]
    %v84 = vld [vmem:[%s2 + $0xb4] sm:$0xf]
    %v85 = vld [vmem:[%s2 + $0xb8] sm:$0xf]
    %v86 = vld [vmem:[%s2 + $0xbc] sm:$0xf]
    %v87 = vld [vmem:[%s2 + $0xc0] sm:$0xf]
    %v88 = vld [vmem:[%s2 + $0xc4] sm:$0xf]
    %v89 = vld [vmem:[%s2 + $0xc8] sm:$0xf]
    %v90 = vld [vmem:[%s2 + $0xcc] sm:$0xf]
    %v91 = vld [vmem:[%s2 + $0xd0] sm:$0xf]
    %v92 = vld [vmem:[%s2 + $0xd4] sm:$0xf]
    %v93 = vld [vmem:[%s2 + $0xd8] sm:$0xf]
    %v94 = vld [vmem:[%s2 + $0xdc] sm:$0xf]
    %v95 = vld [vmem:[%s2 + $0xe0] sm:$0xf]
    %v96 = vld [vmem:[%s2 + $0xe4] sm:$0xf]
    %v97 = vld [vmem:[%s2 + $0xe8] sm:$0xf]
    %v98 = vld [vmem:[%s2 + $0xec] sm:$0xf]
    %v99 = vld [vmem:[%s2 + $0xf0] sm:$0xf]
    %v100 = vld [vmem:[%s2 + $0xf4] sm:$0xf]
    %v101 = vld [vmem:[%s2 + $0xf8] sm:$0xf]
    %v102 = vld [vmem:[%s2 + $0xfc] sm:$0xf]
    %v103 = vld [vmem:[%s2 + $0x100] sm:$0xf]
    %v104 = vld [vmem:[%s2 + $0x104] sm:$0xf]
    %v105 = vld [vmem:[%s2 + $0x108] sm:$0xf]
    %v106 = vld [vmem:[%s2 + $0x10c] sm:$0xf]
    %v107 = vld [vmem:[%s2 + $0x110] sm:$0xf]
    %v108 = vld [vmem:[%s2 + $0x114] sm:$0xf]
    %v109 = vld [vmem:[%s2 + $0x118] sm:$0xf]
    %v110 = vld [vmem:[%s2 + $0x11c] sm:$0xf]
    %v111 = vld [vmem:[%s2 + $0x120] sm:$0xf]
    %v112 = vld [vmem:[%s2 + $0x124] sm:$0xf]
    %v113 = vld [vmem:[%s2 + $0x128] sm:$0xf]
    %v114 = vld [vmem:[%s2 + $0x12c] sm:$0xf]
    %v115 = vld [vmem:[%s2 + $0x130] sm:$0xf]
    %v116 = vld [vmem:[%s2 + $0x134] sm:$0xf]
    %v117 = vld [vmem:[%s2 + $0x138] sm:$0xf]
    %v118 = vld [vmem:[%s2 + $0x13c] sm:$0xf]
    %v119 = vld [vmem:[%s2 + $0x140] sm:$0xf]
    %v120 = vld [vmem:[%s2 + $0x144] sm:$0xf]
    %v121 = vld [vmem:[%s2 + $0x148] sm:$0xf]
    %v122 = vld [vmem:[%s2 + $0x14c] sm:$0xf]
    %v123 = vld [vmem:[%s2 + $0x150] sm:$0xf]
    %v124 = vld [vmem:[%s2 + $0x154] sm:$0xf]
    %v125 = vld [vmem:[%s2 + $0x158] sm:$0xf]
    %v126 = vld [vmem:[%s2 + $0x15c] sm:$0xf]
    %v127 = vld [vmem:[%s2 + $0x160] sm:$0xf]
    %v128 = vld [vmem:[%s2 + $0x164] sm:$0xf]
    %v129 = vld [vmem:[%s2 + $0x168] sm:$0xf]
    %v130 = vld [vmem:[%s2 + $0x16c] sm:$0xf]
    %v131 = vld [vmem:[%s2 + $0x170] sm:$0xf]
    %v132 = vld [vmem:[%s2 + $0x174] sm:$0xf]
    %v133 = vld [vmem:[%s2 + $0x178] sm:$0xf]
    %v134 = vld [vmem:[%s2 + $0x17c] sm:$0xf]
    %v135 = vld [vmem:[%s1] sm:$0xff]
    %v136 = vld [vmem:[%s1 + $0x8] sm:$0xff]
    %v137 = vld [vmem:[%s1 + $0x10] sm:$0xff]
    %v138 = vld [vmem:[%s1 + $0x18] sm:$0xff]
    %v139 = vld [vmem:[%s1 + $0x20] sm:$0xff]
    %v140 = vld [vmem:[%s1 + $0x28] sm:$0xff]
    %v141 = vld [vmem:[%s3] sm:$0xf]
    %v142 = vld [vmem:[%s3 + $0x4] sm:$0xf]
    %v143 = vld [vmem:[%s3 + $0x8] sm:$0xf]
    %v144 = vld [vmem:[%s3 + $0xc] sm:$0xf]
    %v145 = vld [vmem:[%s3 + $0x10] sm:$0xf]
    %v146 = vld [vmem:[%s3 + $0x14] sm:$0xf]
    %v147 = vld [vmem:[%s3 + $0x18] sm:$0xf]
    %v148 = vld [vmem:[%s3 + $0x1c] sm:$0xf]
    %v149 = vld [vmem:[%s3 + $0x20] sm:$0xf]
    %v150 = vld [vmem:[%s3 + $0x24] sm:$0xf]
    %v151 = vld [vmem:[%s3 + $0x28] sm:$0xf]
    %v152 = vld [vmem:[%s3 + $0x2c] sm:$0xf]
    %v153 = vld [vmem:[%s3 + $0x30] sm:$0xf]
    %v154 = vld [vmem:[%s3 + $0x34] sm:$0xf]
    %v155 = vld [vmem:[%s3 + $0x38] sm:$0xf]
    %v156 = vld [vmem:[%s3 + $0x3c] sm:$0xf]
    %v157 = vld [vmem:[%s3 + $0x40] sm:$0xf]
    %v158 = vld [vmem:[%s3 + $0x44] sm:$0xf]
    %v159 = vld [vmem:[%s3 + $0x48] sm:$0xf]
    %v160 = vld [vmem:[%s3 + $0x4c] sm:$0xf]
    %v161 = vld [vmem:[%s3 + $0x50] sm:$0xf]
    %v162 = vld [vmem:[%s3 + $0x54] sm:$0xf]
    %v163 = vld [vmem:[%s3 + $0x58] sm:$0xf]
    %v164 = vld [vmem:[%s3 + $0x5c] sm:$0xf]
    %v165 = vld [vmem:[%s3 + $0x60] sm:$0xf]
    %v166 = vld [vmem:[%s3 + $0x64] sm:$0xf]
    %v167 = vld [vmem:[%s3 + $0x68] sm:$0xf]
    %v168 = vld [vmem:[%s3 + $0x6c] sm:$0xf]
    %v169 = vld [vmem:[%s3 + $0x70] sm:$0xf]
    %v170 = vld [vmem:[%s3 + $0x74] sm:$0xf]
    %v171 = vld [vmem:[%s3 + $0x78] sm:$0xf]
    %v172 = vld [vmem:[%s3 + $0x7c] sm:$0xf]
    %v173 = vld [vmem:[%s3 + $0x80] sm:$0xf]
    %v174 = vld [vmem:[%s3 + $0x84] sm:$0xf]
    %v175 = vld [vmem:[%s3 + $0x88] sm:$0xf]
    %v176 = vld [vmem:[%s3 + $0x8c] sm:$0xf]
    %v177 = vld [vmem:[%s3 + $0x90] sm:$0xf]
    %v178 = vld [vmem:[%s3 + $0x94] sm:$0xf]
    %v179 = vld [vmem:[%s3 + $0x98] sm:$0xf]
    %v180 = vld [vmem:[%s3 + $0x9c] sm:$0xf]
    %v181 = vld [vmem:[%s3 + $0xa0] sm:$0xf]
    %v182 = vld [vmem:[%s3 + $0xa4] sm:$0xf]
    %v183 = vld [vmem:[%s3 + $0xa8] sm:$0xf]
    %v184 = vld [vmem:[%s3 + $0xac] sm:$0xf]
    %v185 = vld [vmem:[%s3 + $0xb0] sm:$0xf]
    %v186 = vld [vmem:[%s3 + $0xb4] sm:$0xf]
    %v187 = vld [vmem:[%s3 + $0xb8] sm:$0xf]
    %v188 = vld [vmem:[%s3 + $0xbc] sm:$0xf]
    %v189 = vld [vmem:[%s3 + $0xc0] sm:$0xf]
    %v190 = vld [vmem:[%s3 + $0xc4] sm:$0xf]
    %v191 = vld [vmem:[%s3 + $0xc8] sm:$0xf]
    %v192 = vld [vmem:[%s3 + $0xcc] sm:$0xf]
    %v193 = vld [vmem:[%s3 + $0xd0] sm:$0xf]
    %v194 = vld [vmem:[%s3 + $0xd4] sm:$0xf]
    %v195 = vld [vmem:[%s3 + $0xd8] sm:$0xf]
    %v196 = vld [vmem:[%s3 + $0xdc] sm:$0xf]
    %v197 = vld [vmem:[%s3 + $0xe0] sm:$0xf]
    %v198 = vld [vmem:[%s3 + $0xe4] sm:$0xf]
    %v199 = vld [vmem:[%s3 + $0xe8] sm:$0xf]
    %v200 = vld [vmem:[%s3 + $0xec] sm:$0xf]
    %v201 = vld [vmem:[%s3 + $0xf0] sm:$0xf]
    %v202 = vld [vmem:[%s3 + $0xf4] sm:$0xf]
    %v203 = vld [vmem:[%s3 + $0xf8] sm:$0xf]
    %v204 = vld [vmem:[%s3 + $0xfc] sm:$0xf]
    %v205 = vld [vmem:[%s3 + $0x100] sm:$0xf]
    %v206 = vld [vmem:[%s3 + $0x104] sm:$0xf]
    %v207 = vld [vmem:[%s3 + $0x108] sm:$0xf]
    %v208 = vld [vmem:[%s3 + $0x10c] sm:$0xf]
    %v209 = vld [vmem:[%s3 + $0x110] sm:$0xf]
    %v210 = vld [vmem:[%s3 + $0x114] sm:$0xf]
    %v211 = vld [vmem:[%s3 + $0x118] sm:$0xf]
    %v212 = vld [vmem:[%s3 + $0x11c] sm:$0xf]
    %v213 = vld [vmem:[%s3 + $0x120] sm:$0xf]
    %v214 = vld [vmem:[%s3 + $0x124] sm:$0xf]
    %v215 = vld [vmem:[%s3 + $0x128] sm:$0xf]
    %v216 = vld [vmem:[%s3 + $0x12c] sm:$0xf]
    %v217 = vld [vmem:[%s3 + $0x130] sm:$0xf]
    %v218 = vld [vmem:[%s3 + $0x134] sm:$0xf]
    %v219 = vld [vmem:[%s3 + $0x138] sm:$0xf]
    %v220 = vld [vmem:[%s3 + $0x13c] sm:$0xf]
    %v221 = vld [vmem:[%s3 + $0x140] sm:$0xf]
    %v222 = vld [vmem:[%s3 + $0x144] sm:$0xf]
    %v223 = vld [vmem:[%s3 + $0x148] sm:$0xf]
    %v224 = vld [vmem:[%s3 + $0x14c] sm:$0xf]
    %v225 = vld [vmem:[%s3 + $0x150] sm:$0xf]
    %v226 = vld [vmem:[%s3 + $0x154] sm:$0xf]
    %v227 = vld [vmem:[%s3 + $0x158] sm:$0xf]
    %v228 = vld [vmem:[%s3 + $0x15c] sm:$0xf]
    %v229 = vld [vmem:[%s3 + $0x160] sm:$0xf]
    %v230 = vld [vmem:[%s3 + $0x164] sm:$0xf]
    %v231 = vld [vmem:[%s3 + $0x168] sm:$0xf]
    %v232 = vld [vmem:[%s3 + $0x16c] sm:$0xf]
    %v233 = vld [vmem:[%s3 + $0x170] sm:$0xf]
    %v234 = vld [vmem:[%s3 + $0x174] sm:$0xf]
    %v235 = vld [vmem:[%s3 + $0x178] sm:$0xf]
    %v236 = vld [vmem:[%s3 + $0x17c] sm:$0xf]
    %v243 = vunpack.c.l.b16 %v135
    %v244 = vunpack.c.h.b16 %v135
    %v245 = vunpack.c.l.b16 %v136
    %v246 = vunpack.c.h.b16 %v136
    %v247 = vunpack.c.l.b16 %v137
    %v248 = vunpack.c.h.b16 %v137
    %v249 = vunpack.c.l.b16 %v138
    %v250 = vunpack.c.h.b16 %v138
    %v251 = vunpack.c.l.b16 %v139
    %v252 = vunpack.c.h.b16 %v139
    %v253 = vunpack.c.l.b16 %v140
    %v254 = vunpack.c.h.b16 %v140
    %v255 = vpack.c.b16 %v249, %v243
    %v256 = vpack.c.b16 %v250, %v244
    %v257 = vpack.c.b16 %v251, %v245
    %v258 = vpack.c.b16 %v252, %v246
    %v259 = vpack.c.b16 %v253, %v247
    %v260 = vpack.c.b16 %v254, %v248
    %v363 = vunpack.c.l.b16 %v141
    %v364 = vunpack.c.l.b16 %v142
    %v365 = vunpack.c.l.b16 %v143
    %v366 = vunpack.c.l.b16 %v144
    %v367 = vunpack.c.l.b16 %v145
    %v368 = vunpack.c.l.b16 %v146
    %v369 = vunpack.c.l.b16 %v147
    %v370 = vunpack.c.l.b16 %v148
    %v371 = vunpack.c.l.b16 %v149
    %v372 = vunpack.c.l.b16 %v150
    %v373 = vunpack.c.l.b16 %v151
    %v374 = vunpack.c.l.b16 %v152
    %v375 = vunpack.c.l.b16 %v153
    %v376 = vunpack.c.l.b16 %v154
    %v377 = vunpack.c.l.b16 %v155
    %v378 = vunpack.c.l.b16 %v156
    %v379 = vunpack.c.l.b16 %v157
    %v380 = vunpack.c.l.b16 %v158
    %v381 = vunpack.c.l.b16 %v159
    %v382 = vunpack.c.l.b16 %v160
    %v383 = vunpack.c.l.b16 %v161
    %v384 = vunpack.c.l.b16 %v162
    %v385 = vunpack.c.l.b16 %v163
    %v386 = vunpack.c.l.b16 %v164
    %v387 = vunpack.c.l.b16 %v165
    %v388 = vunpack.c.l.b16 %v166
    %v389 = vunpack.c.l.b16 %v167
    %v390 = vunpack.c.l.b16 %v168
    %v391 = vunpack.c.l.b16 %v169
    %v392 = vunpack.c.l.b16 %v170
    %v393 = vunpack.c.l.b16 %v171
    %v394 = vunpack.c.l.b16 %v172
    %v395 = vunpack.c.l.b16 %v173
    %v396 = vunpack.c.l.b16 %v174
    %v397 = vunpack.c.l.b16 %v175
    %v398 = vunpack.c.l.b16 %v176
    %v399 = vunpack.c.l.b16 %v177
    %v400 = vunpack.c.l.b16 %v178
    %v401 = vunpack.c.l.b16 %v179
    %v402 = vunpack.c.l.b16 %v180
    %v403 = vunpack.c.l.b16 %v181
    %v404 = vunpack.c.l.b16 %v182
    %v405 = vunpack.c.l.b16 %v183
    %v406 = vunpack.c.l.b16 %v184
    %v407 = vunpack.c.l.b16 %v185
    %v408 = vunpack.c.l.b16 %v186
    %v409 = vunpack.c.l.b16 %v187
    %v410 = vunpack.c.l.b16 %v188
    %v411 = vunpack.c.l.b16 %v189
    %v412 = vunpack.c.l.b16 %v190
    %v413 = vunpack.c.l.b16 %v191
    %v414 = vunpack.c.l.b16 %v192
    %v415 = vunpack.c.l.b16 %v193
    %v416 = vunpack.c.l.b16 %v194
    %v417 = vunpack.c.l.b16 %v195
    %v418 = vunpack.c.l.b16 %v196
    %v419 = vunpack.c.l.b16 %v197
    %v420 = vunpack.c.l.b16 %v198
    %v421 = vunpack.c.l.b16 %v199
    %v422 = vunpack.c.l.b16 %v200
    %v423 = vunpack.c.l.b16 %v201
    %v424 = vunpack.c.l.b16 %v202
    %v425 = vunpack.c.l.b16 %v203
    %v426 = vunpack.c.l.b16 %v204
    %v427 = vunpack.c.l.b16 %v205
    %v428 = vunpack.c.l.b16 %v206
    %v429 = vunpack.c.l.b16 %v207
    %v430 = vunpack.c.l.b16 %v208
    %v431 = vunpack.c.l.b16 %v209
    %v432 = vunpack.c.l.b16 %v210
    %v433 = vunpack.c.l.b16 %v211
    %v434 = vunpack.c.l.b16 %v212
    %v435 = vunpack.c.l.b16 %v213
    %v436 = vunpack.c.l.b16 %v214
    %v437 = vunpack.c.l.b16 %v215
    %v438 = vunpack.c.l.b16 %v216
    %v439 = vunpack.c.l.b16 %v217
    %v440 = vunpack.c.l.b16 %v218
    %v441 = vunpack.c.l.b16 %v219
    %v442 = vunpack.c.l.b16 %v220
    %v443 = vunpack.c.l.b16 %v221
    %v444 = vunpack.c.l.b16 %v222
    %v445 = vunpack.c.l.b16 %v223
    %v446 = vunpack.c.l.b16 %v224
    %v447 = vunpack.c.l.b16 %v225
    %v448 = vunpack.c.l.b16 %v226
    %v449 = vunpack.c.l.b16 %v227
    %v450 = vunpack.c.l.b16 %v228
    %v451 = vunpack.c.l.b16 %v229
    %v452 = vunpack.c.l.b16 %v230
    %v453 = vunpack.c.l.b16 %v231
    %v454 = vunpack.c.l.b16 %v232
    %v455 = vunpack.c.l.b16 %v233
    %v456 = vunpack.c.l.b16 %v234
    %v457 = vunpack.c.l.b16 %v235
    %v458 = vunpack.c.l.b16 %v236
    %v459 = vpack.c.b16 %v364, %v363
    %v460 = vpack.c.b16 %v366, %v365
    %v461 = vpack.c.b16 %v368, %v367
    %v462 = vpack.c.b16 %v370, %v369
    %v463 = vpack.c.b16 %v372, %v371
    %v464 = vpack.c.b16 %v374, %v373
    %v465 = vpack.c.b16 %v376, %v375
    %v466 = vpack.c.b16 %v378, %v377
    %v467 = vpack.c.b16 %v380, %v379
    %v468 = vpack.c.b16 %v382, %v381
    %v469 = vpack.c.b16 %v384, %v383
    %v470 = vpack.c.b16 %v386, %v385
    %v471 = vpack.c.b16 %v388, %v387
    %v472 = vpack.c.b16 %v390, %v389
    %v473 = vpack.c.b16 %v392, %v391
    %v474 = vpack.c.b16 %v394, %v393
    %v475 = vpack.c.b16 %v396, %v395
    %v476 = vpack.c.b16 %v398, %v397
    %v477 = vpack.c.b16 %v400, %v399
    %v478 = vpack.c.b16 %v402, %v401
    %v479 = vpack.c.b16 %v404, %v403
    %v480 = vpack.c.b16 %v406, %v405
    %v481 = vpack.c.b16 %v408, %v407
    %v482 = vpack.c.b16 %v410, %v409
    %v483 = vpack.c.b16 %v412, %v411
    %v484 = vpack.c.b16 %v414, %v413
    %v485 = vpack.c.b16 %v416, %v415
    %v486 = vpack.c.b16 %v418, %v417
    %v487 = vpack.c.b16 %v420, %v419
    %v488 = vpack.c.b16 %v422, %v421
    %v489 = vpack.c.b16 %v424, %v423
    %v490 = vpack.c.b16 %v426, %v425
    %v491 = vpack.c.b16 %v428, %v427
    %v492 = vpack.c.b16 %v430, %v429
    %v493 = vpack.c.b16 %v432, %v431
    %v494 = vpack.c.b16 %v434, %v433
    %v495 = vpack.c.b16 %v436, %v435
    %v496 = vpack.c.b16 %v438, %v437
    %v497 = vpack.c.b16 %v440, %v439
    %v498 = vpack.c.b16 %v442, %v441
    %v499 = vpack.c.b16 %v444, %v443
    %v500 = vpack.c.b16 %v446, %v445
    %v501 = vpack.c.b16 %v448, %v447
    %v502 = vpack.c.b16 %v450, %v449
    %v503 = vpack.c.b16 %v452, %v451
    %v504 = vpack.c.b16 %v454, %v453
    %v505 = vpack.c.b16 %v456, %v455
    %v506 = vpack.c.b16 %v458, %v457
    %555 = vmatpush.bf16.msra.mxu0 %v466
    %556 = vmatpush.bf16.msra.mxu0 %v465
    %557 = vmatpush.bf16.msra.mxu0 %v464
    %558 = vmatpush.bf16.msra.mxu0 %v463
    %559 = vmatpush.bf16.msra.mxu0 %v462
    %560 = vmatpush.bf16.msra.mxu0 %v461
    %561 = vmatpush.bf16.msra.mxu0 %v460
    %562 = vmatpush.bf16.msra.mxu0 %v459
    %563 = vmatmul.bf16.gmra.mxu0 %v255
    %v564 = vpop.f32.mrf.mxu0
    %v565 = vadd.f32 0.0, %v564
    %v566 = vpop.f32.mrf.mxu0
    %v567 = vadd.f32 0.0, %v566
    %568 = vdwg.mxu0
    %569 = vmatpush.bf16.msra.mxu0 %v474
    %570 = vmatpush.bf16.msra.mxu0 %v473
    %571 = vmatpush.bf16.msra.mxu0 %v472
    %572 = vmatpush.bf16.msra.mxu0 %v471
    %573 = vmatpush.bf16.msra.mxu0 %v470
    %574 = vmatpush.bf16.msra.mxu0 %v469
    %575 = vmatpush.bf16.msra.mxu0 %v468
    %576 = vmatpush.bf16.msra.mxu0 %v467
    %577 = vmatmul.bf16.gmra.mxu0 %v256
    %v578 = vpop.f32.mrf.mxu0
    %v579 = vadd.f32 %v565, %v578
    %v580 = vpop.f32.mrf.mxu0
    %v581 = vadd.f32 %v567, %v580
    %582 = vdwg.mxu0
    %583 = vmatpush.bf16.msra.mxu0 %v482
    %584 = vmatpush.bf16.msra.mxu0 %v481
    %585 = vmatpush.bf16.msra.mxu0 %v480
    %586 = vmatpush.bf16.msra.mxu0 %v479
    %587 = vmatpush.bf16.msra.mxu0 %v478
    %588 = vmatpush.bf16.msra.mxu0 %v477
    %589 = vmatpush.bf16.msra.mxu0 %v476
    %590 = vmatpush.bf16.msra.mxu0 %v475
    %591 = vmatmul.bf16.gmra.mxu0 %v257
    %v592 = vpop.f32.mrf.mxu0
    %v593 = vadd.f32 %v579, %v592
    %v594 = vpop.f32.mrf.mxu0
    %v595 = vadd.f32 %v581, %v594
    %596 = vdwg.mxu0
    %597 = vmatpush.bf16.msra.mxu0 %v490
    %598 = vmatpush.bf16.msra.mxu0 %v489
    %599 = vmatpush.bf16.msra.mxu0 %v488
    %600 = vmatpush.bf16.msra.mxu0 %v487
    %601 = vmatpush.bf16.msra.mxu0 %v486
    %602 = vmatpush.bf16.msra.mxu0 %v485
    %603 = vmatpush.bf16.msra.mxu0 %v484
    %604 = vmatpush.bf16.msra.mxu0 %v483
    %605 = vmatmul.bf16.gmra.mxu0 %v258
    %v606 = vpop.f32.mrf.mxu0
    %v607 = vadd.f32 %v593, %v606
    %v608 = vpop.f32.mrf.mxu0
    %v609 = vadd.f32 %v595, %v608
    %610 = vdwg.mxu0
    %611 = vmatpush.bf16.msra.mxu0 %v498
    %612 = vmatpush.bf16.msra.mxu0 %v497
    %613 = vmatpush.bf16.msra.mxu0 %v496
    %614 = vmatpush.bf16.msra.mxu0 %v495
    %615 = vmatpush.bf16.msra.mxu0 %v494
    %616 = vmatpush.bf16.msra.mxu0 %v493
    %617 = vmatpush.bf16.msra.mxu0 %v492
    %618 = vmatpush.bf16.msra.mxu0 %v491
    %619 = vmatmul.bf16.gmra.mxu0 %v259
    %v620 = vpop.f32.mrf.mxu0
    %v621 = vadd.f32 %v607, %v620
    %v622 = vpop.f32.mrf.mxu0
    %v623 = vadd.f32 %v609, %v622
    %624 = vdwg.mxu0
    %625 = vmatpush.bf16.msra.mxu0 %v506
    %626 = vmatpush.bf16.msra.mxu0 %v505
    %627 = vmatpush.bf16.msra.mxu0 %v504
    %628 = vmatpush.bf16.msra.mxu0 %v503
    %629 = vmatpush.bf16.msra.mxu0 %v502
    %630 = vmatpush.bf16.msra.mxu0 %v501
    %631 = vmatpush.bf16.msra.mxu0 %v500
    %632 = vmatpush.bf16.msra.mxu0 %v499
    %633 = vmatmul.bf16.gmra.mxu0 %v260
    %v634 = vpop.f32.mrf.mxu0
    %v635 = vadd.f32 %v621, %v634
    %v636 = vpop.f32.mrf.mxu0
    %v637 = vadd.f32 %v623, %v636
    %638 = vdwg.mxu0
    %v645 = vunpack.c.l.b16 %v33
    %v646 = vunpack.c.h.b16 %v33
    %v647 = vunpack.c.l.b16 %v34
    %v648 = vunpack.c.h.b16 %v34
    %v649 = vunpack.c.l.b16 %v35
    %v650 = vunpack.c.h.b16 %v35
    %v651 = vunpack.c.l.b16 %v36
    %v652 = vunpack.c.h.b16 %v36
    %v653 = vunpack.c.l.b16 %v37
    %v654 = vunpack.c.h.b16 %v37
    %v655 = vunpack.c.l.b16 %v38
    %v656 = vunpack.c.h.b16 %v38
    %v657 = vpack.c.b16 %v651, %v645
    %v658 = vpack.c.b16 %v652, %v646
    %v659 = vpack.c.b16 %v653, %v647
    %v660 = vpack.c.b16 %v654, %v648
    %v661 = vpack.c.b16 %v655, %v649
    %v662 = vpack.c.b16 %v656, %v650
    %v765 = vunpack.c.l.b16 %v39
    %v766 = vunpack.c.l.b16 %v40
    %v767 = vunpack.c.l.b16 %v41
    %v768 = vunpack.c.l.b16 %v42
    %v769 = vunpack.c.l.b16 %v43
    %v770 = vunpack.c.l.b16 %v44
    %v771 = vunpack.c.l.b16 %v45
    %v772 = vunpack.c.l.b16 %v46
    %v773 = vunpack.c.l.b16 %v47
    %v774 = vunpack.c.l.b16 %v48
    %v775 = vunpack.c.l.b16 %v49
    %v776 = vunpack.c.l.b16 %v50
    %v777 = vunpack.c.l.b16 %v51
    %v778 = vunpack.c.l.b16 %v52
    %v779 = vunpack.c.l.b16 %v53
    %v780 = vunpack.c.l.b16 %v54
    %v781 = vunpack.c.l.b16 %v55
    %v782 = vunpack.c.l.b16 %v56
    %v783 = vunpack.c.l.b16 %v57
    %v784 = vunpack.c.l.b16 %v58
    %v785 = vunpack.c.l.b16 %v59
    %v786 = vunpack.c.l.b16 %v60
    %v787 = vunpack.c.l.b16 %v61
    %v788 = vunpack.c.l.b16 %v62
    %v789 = vunpack.c.l.b16 %v63
    %v790 = vunpack.c.l.b16 %v64
    %v791 = vunpack.c.l.b16 %v65
    %v792 = vunpack.c.l.b16 %v66
    %v793 = vunpack.c.l.b16 %v67
    %v794 = vunpack.c.l.b16 %v68
    %v795 = vunpack.c.l.b16 %v69
    %v796 = vunpack.c.l.b16 %v70
    %v797 = vunpack.c.l.b16 %v71
    %v798 = vunpack.c.l.b16 %v72
    %v799 = vunpack.c.l.b16 %v73
    %v800 = vunpack.c.l.b16 %v74
    %v801 = vunpack.c.l.b16 %v75
    %v802 = vunpack.c.l.b16 %v76
    %v803 = vunpack.c.l.b16 %v77
    %v804 = vunpack.c.l.b16 %v78
    %v805 = vunpack.c.l.b16 %v79
    %v806 = vunpack.c.l.b16 %v80
    %v807 = vunpack.c.l.b16 %v81
    %v808 = vunpack.c.l.b16 %v82
    %v809 = vunpack.c.l.b16 %v83
    %v810 = vunpack.c.l.b16 %v84
    %v811 = vunpack.c.l.b16 %v85
    %v812 = vunpack.c.l.b16 %v86
    %v813 = vunpack.c.l.b16 %v87
    %v814 = vunpack.c.l.b16 %v88
    %v815 = vunpack.c.l.b16 %v89
    %v816 = vunpack.c.l.b16 %v90
    %v817 = vunpack.c.l.b16 %v91
    %v818 = vunpack.c.l.b16 %v92
    %v819 = vunpack.c.l.b16 %v93
    %v820 = vunpack.c.l.b16 %v94
    %v821 = vunpack.c.l.b16 %v95
    %v822 = vunpack.c.l.b16 %v96
    %v823 = vunpack.c.l.b16 %v97
    %v824 = vunpack.c.l.b16 %v98
    %v825 = vunpack.c.l.b16 %v99
    %v826 = vunpack.c.l.b16 %v100
    %v827 = vunpack.c.l.b16 %v101
    %v828 = vunpack.c.l.b16 %v102
    %v829 = vunpack.c.l.b16 %v103
    %v830 = vunpack.c.l.b16 %v104
    %v831 = vunpack.c.l.b16 %v105
    %v832 = vunpack.c.l.b16 %v106
    %v833 = vunpack.c.l.b16 %v107
    %v834 = vunpack.c.l.b16 %v108
    %v835 = vunpack.c.l.b16 %v109
    %v836 = vunpack.c.l.b16 %v110
    %v837 = vunpack.c.l.b16 %v111
    %v838 = vunpack.c.l.b16 %v112
    %v839 = vunpack.c.l.b16 %v113
    %v840 = vunpack.c.l.b16 %v114
    %v841 = vunpack.c.l.b16 %v115
    %v842 = vunpack.c.l.b16 %v116
    %v843 = vunpack.c.l.b16 %v117
    %v844 = vunpack.c.l.b16 %v118
    %v845 = vunpack.c.l.b16 %v119
    %v846 = vunpack.c.l.b16 %v120
    %v847 = vunpack.c.l.b16 %v121
    %v848 = vunpack.c.l.b16 %v122
    %v849 = vunpack.c.l.b16 %v123
    %v850 = vunpack.c.l.b16 %v124
    %v851 = vunpack.c.l.b16 %v125
    %v852 = vunpack.c.l.b16 %v126
    %v853 = vunpack.c.l.b16 %v127
    %v854 = vunpack.c.l.b16 %v128
    %v855 = vunpack.c.l.b16 %v129
    %v856 = vunpack.c.l.b16 %v130
    %v857 = vunpack.c.l.b16 %v131
    %v858 = vunpack.c.l.b16 %v132
    %v859 = vunpack.c.l.b16 %v133
    %v860 = vunpack.c.l.b16 %v134
    %v861 = vpack.c.b16 %v766, %v765
    %v862 = vpack.c.b16 %v768, %v767
    %v863 = vpack.c.b16 %v770, %v769
    %v864 = vpack.c.b16 %v772, %v771
    %v865 = vpack.c.b16 %v774, %v773
    %v866 = vpack.c.b16 %v776, %v775
    %v867 = vpack.c.b16 %v778, %v777
    %v868 = vpack.c.b16 %v780, %v779
    %v869 = vpack.c.b16 %v782, %v781
    %v870 = vpack.c.b16 %v784, %v783
    %v871 = vpack.c.b16 %v786, %v785
    %v872 = vpack.c.b16 %v788, %v787
    %v873 = vpack.c.b16 %v790, %v789
    %v874 = vpack.c.b16 %v792, %v791
    %v875 = vpack.c.b16 %v794, %v793
    %v876 = vpack.c.b16 %v796, %v795
    %v877 = vpack.c.b16 %v798, %v797
    %v878 = vpack.c.b16 %v800, %v799
    %v879 = vpack.c.b16 %v802, %v801
    %v880 = vpack.c.b16 %v804, %v803
    %v881 = vpack.c.b16 %v806, %v805
    %v882 = vpack.c.b16 %v808, %v807
    %v883 = vpack.c.b16 %v810, %v809
    %v884 = vpack.c.b16 %v812, %v811
    %v885 = vpack.c.b16 %v814, %v813
    %v886 = vpack.c.b16 %v816, %v815
    %v887 = vpack.c.b16 %v818, %v817
    %v888 = vpack.c.b16 %v820, %v819
    %v889 = vpack.c.b16 %v822, %v821
    %v890 = vpack.c.b16 %v824, %v823
    %v891 = vpack.c.b16 %v826, %v825
    %v892 = vpack.c.b16 %v828, %v827
    %v893 = vpack.c.b16 %v830, %v829
    %v894 = vpack.c.b16 %v832, %v831
    %v895 = vpack.c.b16 %v834, %v833
    %v896 = vpack.c.b16 %v836, %v835
    %v897 = vpack.c.b16 %v838, %v837
    %v898 = vpack.c.b16 %v840, %v839
    %v899 = vpack.c.b16 %v842, %v841
    %v900 = vpack.c.b16 %v844, %v843
    %v901 = vpack.c.b16 %v846, %v845
    %v902 = vpack.c.b16 %v848, %v847
    %v903 = vpack.c.b16 %v850, %v849
    %v904 = vpack.c.b16 %v852, %v851
    %v905 = vpack.c.b16 %v854, %v853
    %v906 = vpack.c.b16 %v856, %v855
    %v907 = vpack.c.b16 %v858, %v857
    %v908 = vpack.c.b16 %v860, %v859
    %957 = vmatpush.bf16.msra.mxu0 %v868
    %958 = vmatpush.bf16.msra.mxu0 %v867
    %959 = vmatpush.bf16.msra.mxu0 %v866
    %960 = vmatpush.bf16.msra.mxu0 %v865
    %961 = vmatpush.bf16.msra.mxu0 %v864
    %962 = vmatpush.bf16.msra.mxu0 %v863
    %963 = vmatpush.bf16.msra.mxu0 %v862
    %964 = vmatpush.bf16.msra.mxu0 %v861
    %965 = vmatmul.bf16.gmra.mxu0 %v657
    %v966 = vpop.f32.mrf.mxu0
    %v967 = vadd.f32 %v635, %v966
    %v968 = vpop.f32.mrf.mxu0
    %v969 = vadd.f32 %v637, %v968
    %970 = vdwg.mxu0
    %971 = vmatpush.bf16.msra.mxu0 %v876
    %972 = vmatpush.bf16.msra.mxu0 %v875
    %973 = vmatpush.bf16.msra.mxu0 %v874
    %974 = vmatpush.bf16.msra.mxu0 %v873
    %975 = vmatpush.bf16.msra.mxu0 %v872
    %976 = vmatpush.bf16.msra.mxu0 %v871
    %977 = vmatpush.bf16.msra.mxu0 %v870
    %978 = vmatpush.bf16.msra.mxu0 %v869
    %979 = vmatmul.bf16.gmra.mxu0 %v658
    %v980 = vpop.f32.mrf.mxu0
    %v981 = vadd.f32 %v967, %v980
    %v982 = vpop.f32.mrf.mxu0
    %v983 = vadd.f32 %v969, %v982
    %984 = vdwg.mxu0
    %985 = vmatpush.bf16.msra.mxu0 %v884
    %986 = vmatpush.bf16.msra.mxu0 %v883
    %987 = vmatpush.bf16.msra.mxu0 %v882
    %988 = vmatpush.bf16.msra.mxu0 %v881
    %989 = vmatpush.bf16.msra.mxu0 %v880
    %990 = vmatpush.bf16.msra.mxu0 %v879
    %991 = vmatpush.bf16.msra.mxu0 %v878
    %992 = vmatpush.bf16.msra.mxu0 %v877
    %993 = vmatmul.bf16.gmra.mxu0 %v659
    %v994 = vpop.f32.mrf.mxu0
    %v995 = vadd.f32 %v981, %v994
    %v996 = vpop.f32.mrf.mxu0
    %v997 = vadd.f32 %v983, %v996
    %998 = vdwg.mxu0
    %999 = vmatpush.bf16.msra.mxu0 %v892
    %1000 = vmatpush.bf16.msra.mxu0 %v891
    %1001 = vmatpush.bf16.msra.mxu0 %v890
    %1002 = vmatpush.bf16.msra.mxu0 %v889
    %1003 = vmatpush.bf16.msra.mxu0 %v888
    %1004 = vmatpush.bf16.msra.mxu0 %v887
    %1005 = vmatpush.bf16.msra.mxu0 %v886
    %1006 = vmatpush.bf16.msra.mxu0 %v885
    %1007 = vmatmul.bf16.gmra.mxu0 %v660
    %v1008 = vpop.f32.mrf.mxu0
    %v1009 = vadd.f32 %v995, %v1008
    %v1010 = vpop.f32.mrf.mxu0
    %v1011 = vadd.f32 %v997, %v1010
    %1012 = vdwg.mxu0
    %1013 = vmatpush.bf16.msra.mxu0 %v900
    %1014 = vmatpush.bf16.msra.mxu0 %v899
    %1015 = vmatpush.bf16.msra.mxu0 %v898
    %1016 = vmatpush.bf16.msra.mxu0 %v897
    %1017 = vmatpush.bf16.msra.mxu0 %v896
    %1018 = vmatpush.bf16.msra.mxu0 %v895
    %1019 = vmatpush.bf16.msra.mxu0 %v894
    %1020 = vmatpush.bf16.msra.mxu0 %v893
    %1021 = vmatmul.bf16.gmra.mxu0 %v661
    %v1022 = vpop.f32.mrf.mxu0
    %v1023 = vadd.f32 %v1009, %v1022
    %v1024 = vpop.f32.mrf.mxu0
    %v1025 = vadd.f32 %v1011, %v1024
    %1026 = vdwg.mxu0
    %1027 = vmatpush.bf16.msra.mxu0 %v908
    %1028 = vmatpush.bf16.msra.mxu0 %v907
    %1029 = vmatpush.bf16.msra.mxu0 %v906
    %1030 = vmatpush.bf16.msra.mxu0 %v905
    %1031 = vmatpush.bf16.msra.mxu0 %v904
    %1032 = vmatpush.bf16.msra.mxu0 %v903
    %1033 = vmatpush.bf16.msra.mxu0 %v902
    %1034 = vmatpush.bf16.msra.mxu0 %v901
    %1035 = vmatmul.bf16.gmra.mxu0 %v662
    %v1036 = vpop.f32.mrf.mxu0
    %v1037 = vadd.f32 %v1023, %v1036
    %v1038 = vpop.f32.mrf.mxu0
    %v1039 = vadd.f32 %v1025, %v1038
    %1040 = vdwg.mxu0
    %v1041 = vld [vmem:[%s4] sm:$0x1]
    %v1043 = vperm.slane %v1041, 0
    %v1045 = vadd.f32 %v1037, %v1043
    %v1046 = vadd.f32 %v1039, %v1043
    %v1047 = vmax.f32 %v1045, 0.0
    %v1048 = vmax.f32 %v1046, 0.0
    %v1049 = vld [vmem:[%s5] sm:$0xff]
    %v1050 = vld [vmem:[%s5 + $0x8] sm:$0xff]
    %v1051 = vld [vmem:[%s5 + $0x10] sm:$0xff]
    %v1052 = vld [vmem:[%s5 + $0x18] sm:$0xff]
    %v1053 = vld [vmem:[%s5 + $0x20] sm:$0xff]
    %v1054 = vld [vmem:[%s5 + $0x28] sm:$0xff]
    %v1055 = vld [vmem:[%s5 + $0x30] sm:$0xff]
    %v1056 = vld [vmem:[%s5 + $0x38] sm:$0xff]
    %v1057 = vld [vmem:[%s6] sm:$0x1]
    %v1059 = vperm.slane %v1057, 0
    %vm1061 = vcmask 523264
    %v1063 = vsel %vm1061, %v1047, 0
    %v1066 = vsel %vm1061, %v1048, 0
    %1068 = vmatpush.msra.mxu0 0.0
    %1069 = vmatpush.msra.mxu0 0.0
    %1070 = vmatpush.msra.mxu0 0.0
    %1071 = vmatpush.msra.mxu0 0.0
    %1072 = vmatpush.msra.mxu0 0.0
    %1073 = vmatpush.msra.mxu0 0.0
    %1074 = vmatpush.msra.mxu0 0.0
    %1075 = vmatpush.msra.mxu0 0.0
    %1076 = vmatpush.msra.mxu0 %v1056
    %1077 = vmatpush.msra.mxu0 %v1055
    %1078 = vmatpush.msra.mxu0 %v1054
    %1079 = vmatpush.msra.mxu0 %v1053
    %1080 = vmatpush.msra.mxu0 %v1052
    %1081 = vmatpush.msra.mxu0 %v1051
    %1082 = vmatpush.msra.mxu0 %v1050
    %1083 = vmatpush.msra.mxu0 %v1049
    %1084 = vmatmul.f32.gmra.mxu0 %v1063
    %v1085 = vpop.f32.mrf.mxu0
    %v1086 = vadd.f32 %v1059, %v1085
    %1087 = vmatmul.f32.gmra.mxu0 %v1066
    %v1088 = vpop.f32.mrf.mxu0
    %v1089 = vadd.f32 %v1059, %v1088
    %1090 = vdwg.mxu0
    %v1091 = vtanh.pop %v1086
    %v1092 = vtanh.pop %v1089
    %v1093 = vld [vmem:[%s7] sm:$0xff]
    %v1094 = vld [vmem:[%s7 + $0x8] sm:$0xff]
    %v1095 = vld [vmem:[%s7 + $0x10] sm:$0xff]
    %v1096 = vld [vmem:[%s7 + $0x18] sm:$0xff]
    %v1097 = vld [vmem:[%s8] sm:$0x1]
    %v1099 = vperm.slane %v1097, 0
    %vm1101 = vcmask 261120
    %v1103 = vsel %vm1101, %v1091, 0
    %v1106 = vsel %vm1101, %v1092, 0
    %1108 = vmatpush.msra.mxu0 0.0
    %1109 = vmatpush.msra.mxu0 0.0
    %1110 = vmatpush.msra.mxu0 0.0
    %1111 = vmatpush.msra.mxu0 0.0
    %1112 = vmatpush.msra.mxu0 0.0
    %1113 = vmatpush.msra.mxu0 0.0
    %1114 = vmatpush.msra.mxu0 0.0
    %1115 = vmatpush.msra.mxu0 0.0
    %1116 = vmatpush.msra.mxu0 0.0
    %1117 = vmatpush.msra.mxu0 0.0
    %1118 = vmatpush.msra.mxu0 0.0
    %1119 = vmatpush.msra.mxu0 0.0
    %1120 = vmatpush.msra.mxu0 %v1096
    %1121 = vmatpush.msra.mxu0 %v1095
    %1122 = vmatpush.msra.mxu0 %v1094
    %1123 = vmatpush.msra.mxu0 %v1093
    %1124 = vmatmul.f32.gmra.mxu0 %v1103
    %v1125 = vpop.f32.mrf.mxu0
    %v1126 = vadd.f32 %v1099, %v1125
    %1127 = vmatmul.f32.gmra.mxu0 %v1106
    %v1128 = vpop.f32.mrf.mxu0
    %v1129 = vadd.f32 %v1099, %v1128
    %1130 = vdwg.mxu0
    %v1131 = vlaneseq
    %v1132 = vand.u32 %v1131, 127
    %vm1133 = vcmp.eq.s32.totalorder %v1132, 33
    %v1134 = vxor.u32 %v1126, 2147483648
    %v1135 = vxor.u32 %v1129, 2147483648
    %v1136 = vmul.f32 %v1134, 1.442695
    %v1137 = vpow.pop %v1136
    %v1138 = vmul.f32 %v1135, 1.442695
    %v1139 = vpow.pop %v1138
    %v1140 = vadd.f32 %v1137, 1.0
    %v1141 = vadd.f32 %v1139, 1.0
    %v1142 = vrcp.pop %v1140
    %v1143 = vmul.f32 %v1140, %v1142
    %v1144 = vsub.f32 1.0, %v1143
    %v1145 = vmul.f32 %v1142, %v1144
    %v1146 = vadd.f32 %v1142, %v1145
    %vm1147 = vweird.f32 %v1140
    %vm1148 = vweird.f32 %v1142
    %vm1149 = vmor %vm1147, %vm1148
    %v1150 = vsel %vm1149, %v1142, %v1146
    %v1151 = vand.u32 2147483647, %v1140
    %vm1152 = vcmp.eq.f32.partialorder %v1151, 8.507059e+37
    %v1153 = vand.u32 %v1140, 2147483648
    %v1154 = vor.u32 1.1754944e-38, %v1153
    %v1155 = vsel %vm1152, %v1154, %v1150
    %v1156 = vmul.f32 1.0, %v1155
    %v1157 = vrcp.pop %v1141
    %v1158 = vmul.f32 %v1141, %v1157
    %v1159 = vsub.f32 1.0, %v1158
    %v1160 = vmul.f32 %v1157, %v1159
    %v1161 = vadd.f32 %v1157, %v1160
    %vm1162 = vweird.f32 %v1141
    %vm1163 = vweird.f32 %v1157
    %vm1164 = vmor %vm1162, %vm1163
    %v1165 = vsel %vm1164, %v1157, %v1161
    %v1166 = vand.u32 2147483647, %v1141
    %vm1167 = vcmp.eq.f32.partialorder %v1166, 8.507059e+37
    %v1168 = vand.u32 %v1141, 2147483648
    %v1169 = vor.u32 1.1754944e-38, %v1168
    %v1170 = vsel %vm1167, %v1169, %v1165
    %v1171 = vmul.f32 1.0, %v1170
    %v1172 = vsel %vm1133, %v1156, %v1126
    %v1173 = vsel %vm1133, %v1171, %v1129
    %vm1174 = vcmask 277504
    %1175 = vst.msk [vmem:[#allocation2] sm:$0xff] %vm1174, %v1172
    %1176 = vst.msk [vmem:[#allocation2 + $0x8] sm:$0xff] %vm1174, %v1173
    // Predicated region
    $region38: #{tpu_custom_call.1} parent=1 // pred_check
      _
    $region39: #{tpu_custom_call.1} parent=1 // pred_check_branch
      %1178 = sbr.rel (0) target = $region41
    $region40: #{tpu_custom_call.1} parent=1 // pred_region
      %1180 = vsyncadd [#allocation3], 0
      %s1181 = sshll.u32 [#allocation2], 4
      %s1182 = int_to_ptr.vmem [resolvable:$true] %s1181
      %s1183 = sshll.u32 %s9, 4
      %s1184 = int_to_ptr.hbm [resolvable:$true] %s1183
      %1189 = dma.vmem_to_hbm [thread:$0]  %s1182, 256, %s1184, [#allocation3], 128, 128, 8
    $region41: #{tpu_custom_call.1} parent=1 // pred_fallthru
      _
    // Predicated region
    $region42: #{tpu_custom_call.1} parent=1 // pred_check
      _
    $region43: #{tpu_custom_call.1} parent=1 // pred_check_branch
      %1191 = sbr.rel (0) target = $region45
    $region44: #{tpu_custom_call.1} parent=1 // pred_region
      %1193 = dma.done [#allocation3], 256
    $region45: #{tpu_custom_call.1} parent=1 // pred_fallthru
      _
    %1194 = vsyncpa [#allocation3], 1

</llo_original>
